<compile_context>
chip_gen: v7x
topology: tpu7x:2x2x1
jax: 0.10.0
libtpu: 0.0.40
codegen_flags: <defaults>
</compile_context>

<pallas_src>
import jax
import jax.numpy as jnp
from jax.experimental import pallas as pl
from jax.experimental.pallas import tpu as pltpu


def _round_up(x, m):
    return ((x + m - 1) // m) * m


def _recompute_kernel(x_ref, w_ref, b_ref, o_ref, m_ref, l_ref):
    """Grid = (row_tiles, 2 passes, vocab_tiles); logits recomputed in pass 1."""
    p = pl.program_id(1)   # 0: reduction pass, 1: write pass
    k = pl.program_id(2)   # vocab tile index

    # bf16 MXU matmul, f32 accumulation; bias/softmax math in f32.
    s = jnp.dot(x_ref[...], w_ref[...], preferred_element_type=jnp.float32)
    s = s + b_ref[...]

    @pl.when(jnp.logical_and(p == 0, k == 0))
    def _init():
        m_ref[...] = jnp.full(m_ref.shape, -jnp.inf, dtype=m_ref.dtype)
        l_ref[...] = jnp.zeros(l_ref.shape, dtype=l_ref.dtype)

    @pl.when(p == 0)
    def _reduce():
        # Online (flash-style) running max / logsumexp over the vocab axis.
        m_prev = m_ref[...]
        m_new = jnp.maximum(m_prev, jnp.max(s, axis=-1, keepdims=True))
        l_ref[...] = (l_ref[...] * jnp.exp(m_prev - m_new)
                      + jnp.sum(jnp.exp(s - m_new), axis=-1, keepdims=True))
        m_ref[...] = m_new

    @pl.when(jnp.logical_and(p == 1, k == 0))
    def _finalize():
        # Hoist the normalizer out of the pass-1 vocab loop: m_ref <- log Z.
        m_ref[...] = m_ref[...] + jnp.log(l_ref[...])

    @pl.when(p == 1)
    def _write():
        o_ref[...] = (s - m_ref[...]).astype(o_ref.dtype)


def _resident_kernel(x_ref, w_ref, b_ref, o_ref, m_ref, l_ref, s_ref):
    """Same two-pass structure, but the logits row-block stays resident in VMEM:
    pass 1 does no matmul (and, via its index_map, no W streaming)."""
    p = pl.program_id(1)
    k = pl.program_id(2)

    @pl.when(jnp.logical_and(p == 0, k == 0))
    def _init():
        m_ref[...] = jnp.full(m_ref.shape, -jnp.inf, dtype=m_ref.dtype)
        l_ref[...] = jnp.zeros(l_ref.shape, dtype=l_ref.dtype)

    @pl.when(p == 0)
    def _reduce():
        s = jnp.dot(x_ref[...], w_ref[...], preferred_element_type=jnp.float32)
        s = s + b_ref[...]
        s_ref[k] = s.astype(s_ref.dtype)          # park logits tile in VMEM
        m_prev = m_ref[...]
        m_new = jnp.maximum(m_prev, jnp.max(s, axis=-1, keepdims=True))
        l_ref[...] = (l_ref[...] * jnp.exp(m_prev - m_new)
                      + jnp.sum(jnp.exp(s - m_new), axis=-1, keepdims=True))
        m_ref[...] = m_new

    @pl.when(jnp.logical_and(p == 1, k == 0))
    def _finalize():
        m_ref[...] = m_ref[...] + jnp.log(l_ref[...])   # cache log Z

    @pl.when(p == 1)
    def _write():
        o_ref[...] = (s_ref[k].astype(jnp.float32) - m_ref[...]).astype(o_ref.dtype)


def generator_forward(x, w, b, *, tm=512, tv=1024,
                      compute_dtype=jnp.bfloat16, out_dtype=jnp.bfloat16,
                      mode="auto", vmem_limit_bytes=None):
    """y = log_softmax(x @ w + b, axis=-1).

    x: [B, S, D], w: [D, V] (torch nn.Linear weight transposed), b: [V].
    Returns [B, S, V] log-probabilities in `out_dtype`.
    mode: "auto" (pick by VMEM budget), "resident", or "recompute".
    """
    B, S, D = x.shape
    V = w.shape[1]
    N = B * S

    # ---- Physical VMEM budget (v7x: 64 MiB; v5e/v6e: 128 MiB). ----
    try:
        phys_vmem = int(pltpu.get_tpu_info().vmem_capacity_bytes)
    except Exception:
        phys_vmem = 64 * 1024 * 1024           # conservative: safe everywhere
    budget = int(phys_vmem * 0.72)             # headroom for compiler internals

    c_item = jnp.dtype(compute_dtype).itemsize
    o_item = jnp.dtype(out_dtype).itemsize

    # ---- Row tile: sublane-aligned, padded instead of asserted. ----
    tm = max(8, min(tm, _round_up(N, 8)))
    tm = _round_up(tm, 8)
    # Megacore (v7x has 2 TCs): keep >= 2 row tiles whenever tm can stay >= 256.
    if N >= 512 and _round_up(N, tm) == tm:
        tm = _round_up((N + 1) // 2, 8)

    # ---- Vocab tile: lane-aligned (unmasked stores, streamed W tiles). ----
    tv = max(128, min(tv, _round_up(V, 128)))
    tv = _round_up(tv, 128)

    def footprint(tm_, tv_, scratch_item):
        v_pad_ = _round_up(V, tv_)
        f = 0
        f += 2 * tm_ * D * c_item              # x, double-buffered
        f += 2 * D * tv_ * c_item              # W, double-buffered
        f += 2 * 8 * tv_ * 4                   # bias (sublane-padded)
        f += 2 * tm_ * tv_ * o_item            # output, double-buffered
        f += 2 * tm_ * 128 * 4                 # m/l scratch (lane-padded)
        if scratch_item:
            f += (v_pad_ // tv_) * tm_ * tv_ * scratch_item   # resident logits
        return f

    # Shrink tiles until the streamed (recompute) footprint fits the budget.
    while footprint(tm, tv, 0) > budget and tv > 128:
        tv = max(128, _round_up(tv // 2, 128))
    while footprint(tm, tv, 0) > budget and tm > 256:
        tm = max(256, _round_up(tm // 2, 8))

    # Kernel variant: keep logits resident when VMEM allows (drops the pass-1
    # matmul and half the W HBM stream); prefer f32 scratch, else bf16.
    scratch_dtype = None
    if mode in ("auto", "resident"):
        if footprint(tm, tv, 4) <= budget:
            scratch_dtype = jnp.float32
        elif footprint(tm, tv, 2) <= budget:
            scratch_dtype = jnp.bfloat16
        elif mode == "resident":
            scratch_dtype = jnp.bfloat16       # forced by caller
    resident = scratch_dtype is not None

    n_pad = _round_up(N, tm)
    v_pad = _round_up(V, tv)
    n_row_tiles = n_pad // tm
    n_vocab_tiles = v_pad // tv

    x2 = x.reshape(N, D).astype(compute_dtype)
    if n_pad != N:
        x2 = jnp.pad(x2, ((0, n_pad - N), (0, 0)))

    w2 = w.astype(compute_dtype)
    b2 = b.astype(jnp.float32)
    if v_pad != V:
        w2 = jnp.pad(w2, ((0, 0), (0, v_pad - V)))
        # Very negative (finite) bias on padded vocab columns: exp underflows
        # to 0 so real-column log-softmax is unaffected.  v_pad - V < tv, so
        # the last vocab tile always contains at least one real column.
        b2 = jnp.pad(b2, (0, v_pad - V), constant_values=-1e30)
    b2 = b2.reshape(1, v_pad)

    grid = (n_row_tiles, 2, n_vocab_tiles)

    if resident:
        kernel = _resident_kernel
        # Pass 1 never touches W / bias: park their block index at (*, 0) so the
        # weight HBM stream is only paid once per row tile.
        w_spec = pl.BlockSpec((D, tv), lambda i, p, k: (0, k * (1 - p)))
        b_spec = pl.BlockSpec((1, tv), lambda i, p, k: (0, k * (1 - p)))
        scratch_shapes = [
            pltpu.VMEM((tm, 1), jnp.float32),                     # running max / log Z
            pltpu.VMEM((tm, 1), jnp.float32),                     # running sum(exp)
            pltpu.VMEM((n_vocab_tiles, tm, tv), scratch_dtype),   # resident logits
        ]
        flops = 2 * n_pad * D * v_pad
        w_stream = n_row_tiles * w2.size * c_item
    else:
        kernel = _recompute_kernel
        w_spec = pl.BlockSpec((D, tv), lambda i, p, k: (0, k))
        b_spec = pl.BlockSpec((1, tv), lambda i, p, k: (0, k))
        scratch_shapes = [
            pltpu.VMEM((tm, 1), jnp.float32),
            pltpu.VMEM((tm, 1), jnp.float32),
        ]
        flops = 4 * n_pad * D * v_pad
        w_stream = 2 * n_row_tiles * w2.size * c_item

    cost = pl.CostEstimate(
        flops=flops,
        transcendentals=n_pad * v_pad + n_pad,
        bytes_accessed=(x2.size * c_item + w_stream + b2.size * 4
                        + n_pad * v_pad * o_item),
    )

    if vmem_limit_bytes is None:
        # Always raise the scoped limit (defaults are 16/32 MiB): use most of
        # physical VMEM, staying safe on v7x's 64 MiB parts.
        vmem_limit_bytes = max(32 * 1024 * 1024,
                               min(int(phys_vmem * 0.9), 112 * 1024 * 1024))

    out = pl.pallas_call(
        kernel,
        out_shape=jax.ShapeDtypeStruct((n_pad, v_pad), out_dtype),
        grid_spec=pltpu.PrefetchScalarGridSpec(
            num_scalar_prefetch=0,
            grid=grid,
            in_specs=[
                pl.BlockSpec((tm, D), lambda i, p, k: (i, 0)),   # activations
                w_spec,                                          # weight tile
                b_spec,                                          # bias tile
            ],
            # Pass 0 parks the output on block (i, 0); pass 1 visits (i, k) and
            # writes every block exactly once before it is flushed to HBM.
            # NOTE: relies on the pass axis being outside the vocab axis.
            out_specs=pl.BlockSpec((tm, tv), lambda i, p, k: (i, k * p)),
            scratch_shapes=scratch_shapes,
        ),
        compiler_params=pltpu.CompilerParams(
            dimension_semantics=("parallel", "arbitrary", "arbitrary"),
            vmem_limit_bytes=vmem_limit_bytes,
        ),
        cost_estimate=cost,
    )(x2, w2, b2)

    return out[:N, :V].reshape(B, S, V)


if __name__ == "__main__":
    # Small shapes consistent with the module: d_model=32, vocab=64, batch=2, seq=8.
    B, S, D, V = 2, 8, 32, 64

    key = jax.random.PRNGKey(0)
    kx, kw, kb = jax.random.split(key, 3)

    x = jax.random.normal(kx, (B, S, D), dtype=jnp.float32)
    # nn.Linear(d_model, vocab) weight stored transposed as [D, V].
    w = jax.random.normal(kw, (D, V), dtype=jnp.float32) * (1.0 / jnp.sqrt(D))
    b = jax.random.normal(kb, (V,), dtype=jnp.float32) * 0.01

    # Reference using the same bf16-matmul / f32-accumulation contraction.
    logits_ref = jnp.dot(x.reshape(-1, D).astype(jnp.bfloat16),
                         w.astype(jnp.bfloat16),
                         preferred_element_type=jnp.float32) + b
    ref = jax.nn.log_softmax(logits_ref, axis=-1).reshape(B, S, V)

    # Exercise both kernel variants (auto picks "resident" at these shapes).
    for mode in ("auto", "recompute"):
        y = generator_forward(x, w, b, out_dtype=jnp.float32, mode=mode)
        y = jax.block_until_ready(y)
        assert y.shape == (B, S, V)
        assert jnp.allclose(y, ref, atol=2e-3, rtol=2e-3), f"mismatch ({mode})"
        assert jnp.allclose(jnp.exp(y).sum(-1), 1.0, atol=1e-3), f"not normalized ({mode})"

    print("KERNEL_OK")
</pallas_src>

<mosaic_0001>
module attributes {stable_mosaic.version = 11 : i64} {
  func.func @_resident_kernel(%arg0: i32, %arg1: i32, %arg2: i32, %arg3: memref<16x32xbf16, #tpu.memory_space<vmem>>, %arg4: memref<32x128xbf16, #tpu.memory_space<vmem>>, %arg5: memref<1x128xf32, #tpu.memory_space<vmem>>, %arg6: memref<16x128xf32, #tpu.memory_space<vmem>>, %arg7: memref<16x1xf32, #tpu.memory_space<vmem>>, %arg8: memref<16x1xf32, #tpu.memory_space<vmem>>, %arg9: memref<1x16x128xf32, #tpu.memory_space<vmem>>) attributes {dimension_semantics = [#tpu.dimension_semantics<parallel>, #tpu.dimension_semantics<arbitrary>, #tpu.dimension_semantics<arbitrary>], iteration_bounds = array<i64: 1, 2, 1>, scalar_prefetch = 0 : i64, scratch_operands = 3 : i64, tpu.core_type = #tpu.core_type<tc>, window_params = [{transform_indices = @transform_0, window_bounds = array<i64: 16, 32>}, {transform_indices = @transform_1, window_bounds = array<i64: 32, 128>}, {transform_indices = @transform_2, window_bounds = array<i64: 1, 128>}, {transform_indices = @transform_3, window_bounds = array<i64: 16, 128>}]} {
    %c0_i32 = arith.constant 0 : i32
    %0 = arith.cmpi eq, %arg1, %c0_i32 : i32
    %c0_i32_0 = arith.constant 0 : i32
    %1 = arith.cmpi eq, %arg2, %c0_i32_0 : i32
    %2 = arith.andi %0, %1 : i1
    %3 = arith.extui %2 : i1 to i32
    %c0_i32_1 = arith.constant 0 : i32
    %4 = arith.cmpi ne, %3, %c0_i32_1 : i32
    scf.if %4 {
      %cst = arith.constant 0xFF800000 : f32
      %16 = vector.broadcast %cst : f32 to vector<16x1xf32>
      %c0 = arith.constant 0 : index
      %c0_8 = arith.constant 0 : index
      %17 = vector.load %arg7[%c0, %c0_8] : memref<16x1xf32, #tpu.memory_space<vmem>>, vector<16x1xf32>
      tpu.vector_store %arg7[%c0, %c0_8], %16 {strides = array<i32>} : memref<16x1xf32, #tpu.memory_space<vmem>>, vector<16x1xf32>,
      %cst_9 = arith.constant 0.000000e+00 : f32
      %18 = vector.broadcast %cst_9 : f32 to vector<16x1xf32>
      %c0_10 = arith.constant 0 : index
      %c0_11 = arith.constant 0 : index
      %19 = vector.load %arg8[%c0_10, %c0_11] : memref<16x1xf32, #tpu.memory_space<vmem>>, vector<16x1xf32>
      tpu.vector_store %arg8[%c0_10, %c0_11], %18 {strides = array<i32>} : memref<16x1xf32, #tpu.memory_space<vmem>>, vector<16x1xf32>,
    } else {
    }
    %c0_i32_2 = arith.constant 0 : i32
    %5 = arith.cmpi eq, %arg1, %c0_i32_2 : i32
    %6 = arith.extui %5 : i1 to i32
    %c0_i32_3 = arith.constant 0 : i32
    %7 = arith.cmpi ne, %6, %c0_i32_3 : i32
    scf.if %7 {
      %c0 = arith.constant 0 : index
      %c0_8 = arith.constant 0 : index
      %16 = vector.load %arg3[%c0, %c0_8] : memref<16x32xbf16, #tpu.memory_space<vmem>>, vector<16x32xbf16>
      %c0_9 = arith.constant 0 : index
      %c0_10 = arith.constant 0 : index
      %17 = vector.load %arg4[%c0_9, %c0_10] : memref<32x128xbf16, #tpu.memory_space<vmem>>, vector<32x128xbf16>
      %cst = arith.constant dense<0.000000e+00> : vector<16x128xf32>
      %18 = tpu.matmul %16, %17, %cst {dimension_numbers = #tpu.dot_dimension_numbers<[1], [0], [0], [1], [0, 0, 1, 1], [], []>} : vector<16x32xbf16>, vector<32x128xbf16>, vector<16x128xf32> -> vector<16x128xf32>
      %c0_11 = arith.constant 0 : index
      %c0_12 = arith.constant 0 : index
      %19 = vector.load %arg5[%c0_11, %c0_12] : memref<1x128xf32, #tpu.memory_space<vmem>>, vector<1x128xf32>
      %20 = vector.broadcast %19 : vector<1x128xf32> to vector<16x128xf32>
      %21 = arith.addf %18, %20 : vector<16x128xf32>
      %22 = arith.index_cast %arg2 : i32 to index
      %c0_13 = arith.constant 0 : index
      %c0_14 = arith.constant 0 : index
      %23 = vector.load %arg9[%22, %c0_13, %c0_14] : memref<1x16x128xf32, #tpu.memory_space<vmem>>, vector<1x16x128xf32>
      %24 = vector.shape_cast %23 : vector<1x16x128xf32> to vector<16x128xf32>
      %25 = vector.shape_cast %21 : vector<16x128xf32> to vector<1x16x128xf32>
      tpu.vector_store %arg9[%22, %c0_13, %c0_14], %25 {strides = array<i32>} : memref<1x16x128xf32, #tpu.memory_space<vmem>>, vector<1x16x128xf32>,
      %c0_15 = arith.constant 0 : index
      %c0_16 = arith.constant 0 : index
      %26 = vector.load %arg7[%c0_15, %c0_16] : memref<16x1xf32, #tpu.memory_space<vmem>>, vector<16x1xf32>
      %cst_17 = arith.constant dense<0xFF800000> : vector<16xf32>
      %27 = vector.multi_reduction <maximumf>, %21, %cst_17 [1] : vector<16x128xf32> to vector<16xf32>
      %28 = vector.shape_cast %27 : vector<16xf32> to vector<16x1xf32>
      %29 = arith.maximumf %26, %28 : vector<16x1xf32>
      %c0_18 = arith.constant 0 : index
      %c0_19 = arith.constant 0 : index
      %30 = vector.load %arg8[%c0_18, %c0_19] : memref<16x1xf32, #tpu.memory_space<vmem>>, vector<16x1xf32>
      %31 = arith.subf %26, %29 : vector<16x1xf32>
      %32 = math.exp %31 : vector<16x1xf32>
      %33 = arith.mulf %30, %32 : vector<16x1xf32>
      %34 = vector.broadcast %29 : vector<16x1xf32> to vector<16x128xf32>
      %35 = arith.subf %21, %34 : vector<16x128xf32>
      %36 = math.exp %35 : vector<16x128xf32>
      %cst_20 = arith.constant dense<0.000000e+00> : vector<16xf32>
      %37 = vector.multi_reduction <add>, %36, %cst_20 [1] : vector<16x128xf32> to vector<16xf32>
      %38 = vector.shape_cast %37 : vector<16xf32> to vector<16x1xf32>
      %39 = arith.addf %33, %38 : vector<16x1xf32>
      %c0_21 = arith.constant 0 : index
      %c0_22 = arith.constant 0 : index
      %40 = vector.load %arg8[%c0_21, %c0_22] : memref<16x1xf32, #tpu.memory_space<vmem>>, vector<16x1xf32>
      tpu.vector_store %arg8[%c0_21, %c0_22], %39 {strides = array<i32>} : memref<16x1xf32, #tpu.memory_space<vmem>>, vector<16x1xf32>,
      %c0_23 = arith.constant 0 : index
      %c0_24 = arith.constant 0 : index
      %41 = vector.load %arg7[%c0_23, %c0_24] : memref<16x1xf32, #tpu.memory_space<vmem>>, vector<16x1xf32>
      tpu.vector_store %arg7[%c0_23, %c0_24], %29 {strides = array<i32>} : memref<16x1xf32, #tpu.memory_space<vmem>>, vector<16x1xf32>,
    } else {
    }
    %c1_i32 = arith.constant 1 : i32
    %8 = arith.cmpi eq, %arg1, %c1_i32 : i32
    %c0_i32_4 = arith.constant 0 : i32
    %9 = arith.cmpi eq, %arg2, %c0_i32_4 : i32
    %10 = arith.andi %8, %9 : i1
    %11 = arith.extui %10 : i1 to i32
    %c0_i32_5 = arith.constant 0 : i32
    %12 = arith.cmpi ne, %11, %c0_i32_5 : i32
    scf.if %12 {
      %c0 = arith.constant 0 : index
      %c0_8 = arith.constant 0 : index
      %16 = vector.load %arg7[%c0, %c0_8] : memref<16x1xf32, #tpu.memory_space<vmem>>, vector<16x1xf32>
      %c0_9 = arith.constant 0 : index
      %c0_10 = arith.constant 0 : index
      %17 = vector.load %arg8[%c0_9, %c0_10] : memref<16x1xf32, #tpu.memory_space<vmem>>, vector<16x1xf32>
      %18 = math.log %17 : vector<16x1xf32>
      %19 = arith.addf %16, %18 : vector<16x1xf32>
      %c0_11 = arith.constant 0 : index
      %c0_12 = arith.constant 0 : index
      %20 = vector.load %arg7[%c0_11, %c0_12] : memref<16x1xf32, #tpu.memory_space<vmem>>, vector<16x1xf32>
      tpu.vector_store %arg7[%c0_11, %c0_12], %19 {strides = array<i32>} : memref<16x1xf32, #tpu.memory_space<vmem>>, vector<16x1xf32>,
    } else {
    }
    %c1_i32_6 = arith.constant 1 : i32
    %13 = arith.cmpi eq, %arg1, %c1_i32_6 : i32
    %14 = arith.extui %13 : i1 to i32
    %c0_i32_7 = arith.constant 0 : i32
    %15 = arith.cmpi ne, %14, %c0_i32_7 : i32
    scf.if %15 {
      %16 = arith.index_cast %arg2 : i32 to index
      %c0 = arith.constant 0 : index
      %c0_8 = arith.constant 0 : index
      %17 = vector.load %arg9[%16, %c0, %c0_8] : memref<1x16x128xf32, #tpu.memory_space<vmem>>, vector<1x16x128xf32>
      %18 = vector.shape_cast %17 : vector<1x16x128xf32> to vector<16x128xf32>
      %c0_9 = arith.constant 0 : index
      %c0_10 = arith.constant 0 : index
      %19 = vector.load %arg7[%c0_9, %c0_10] : memref<16x1xf32, #tpu.memory_space<vmem>>, vector<16x1xf32>
      %20 = vector.broadcast %19 : vector<16x1xf32> to vector<16x128xf32>
      %21 = arith.subf %18, %20 : vector<16x128xf32>
      %c0_11 = arith.constant 0 : index
      %c0_12 = arith.constant 0 : index
      %22 = vector.load %arg6[%c0_11, %c0_12] : memref<16x128xf32, #tpu.memory_space<vmem>>, vector<16x128xf32>
      tpu.vector_store %arg6[%c0_11, %c0_12], %21 {strides = array<i32>} : memref<16x128xf32, #tpu.memory_space<vmem>>, vector<16x128xf32>,
    } else {
    }
    return
  }
  func.func @transform_0(%arg0: i32, %arg1: i32, %arg2: i32) -> (i32, i32) {
    %c0_i32 = arith.constant 0 : i32
    %c0_i32_0 = arith.constant 0 : i32
    return %arg0, %c0_i32 : i32, i32
  }
  func.func @transform_1(%arg0: i32, %arg1: i32, %arg2: i32) -> (i32, i32) {
    %c1_i32 = arith.constant 1 : i32
    %0 = arith.subi %c1_i32, %arg1 : i32
    %1 = arith.muli %arg2, %0 : i32
    %c0_i32 = arith.constant 0 : i32
    %c0_i32_0 = arith.constant 0 : i32
    return %c0_i32, %1 : i32, i32
  }
  func.func @transform_2(%arg0: i32, %arg1: i32, %arg2: i32) -> (i32, i32) {
    %c1_i32 = arith.constant 1 : i32
    %0 = arith.subi %c1_i32, %arg1 : i32
    %1 = arith.muli %arg2, %0 : i32
    %c0_i32 = arith.constant 0 : i32
    %c0_i32_0 = arith.constant 0 : i32
    return %c0_i32, %1 : i32, i32
  }
  func.func @transform_3(%arg0: i32, %arg1: i32, %arg2: i32) -> (i32, i32) {
    %0 = arith.muli %arg2, %arg1 : i32
    %c0_i32 = arith.constant 0 : i32
    return %arg0, %0 : i32, i32
  }
}

</mosaic_0001>

<llo_original>
// kernel: tpu_custom_call.1
$region0: #{tpu_custom_call.1}
  #allocation0 [shape = 'u32[]', space=smem, size = 0x4, offset = 0x4, fixed_abs, tag = 'smem constant byte address 0x4 - core index']
  #allocation1 [shape = 'u32[144,128]{1,0:T(1,128)}', space=vmem, size = 0x12000, scoped, tag = 'internal scratch']
  #allocation2 [shape = 'f32[16,1]{1,0:T(8,128)}', space=vmem, size = 0x2000, scoped, tag = 'scratch operand']
  #allocation3 [shape = 'f32[16,1]{1,0:T(8,128)}', space=vmem, size = 0x2000, scoped, tag = 'scratch operand']
  #allocation4 [shape = 'f32[1,16,128]{2,1,0:T(8,128)}', space=vmem, size = 0x2000, scoped, tag = 'scratch operand']
  %s0 = inlined_call_operand.hbm [shape: bf16[16,32], index: 0, kind: input, shape index: {}]
  %s1 = inlined_call_operand.hbm [shape: bf16[32,128], index: 1, kind: input, shape index: {}]
  %s2 = inlined_call_operand.vmem [shape: f32[1,128], index: 2, kind: input, shape index: {}]
  %s3 = inlined_call_operand.hbm [shape: f32[16,128], index: 3, kind: output, shape index: {}]
  %s4 = sld [smem:[#allocation0]]
  $region69: #{tpu_custom_call.1} parent=0
    _
  %s6 = ssub.s32 1, %s4
  %s7 = scalar_select 0, %s6, %s4
  $region1: #{tpu_custom_call.1} parent=0
    #allocation5 [shape = 'u8[4096]{0}', space=vmem, size = 0x1000, scoped, tag = 'input window, operand 0, single buffered']
    #allocation6 [shape = 's32[2]{0}', space=sflag, size = 0x8, scoped, tag = 'scoped memory for tpu_custom_call.1']
    #allocation7 [shape = 's32[2]{0}', space=sflag, size = 0x8, scoped, tag = 'scoped memory for tpu_custom_call.1']
    #allocation8 [shape = 'u8[16384]{0}', space=vmem, size = 0x4000, scoped, tag = 'input window, operand 1']
    #allocation9 [shape = 's32[2]{0}', space=sflag, size = 0x8, scoped, tag = 'scoped memory for tpu_custom_call.1']
    #allocation10 [shape = 'u8[16384]{0}', space=vmem, size = 0x4000, scoped, tag = 'output window, operand 0']
    %8 = vsyncpa [#allocation6], 0
    %9 = vsyncpa [#allocation9], 0
    %s10 = scalar_lea.sflag [#allocation9], 1
    %11 = vsyncpa %s10, 0
    %12 = vsyncpa [#allocation7], 0
    %s13 = scalar_lea.sflag [#allocation7], 1
    %14 = vsyncpa %s13, 0
    loop: start=0, step=1, limit=4
    $region2: #{tpu_custom_call.1} parent=1 // loop_pre_header
      _
    $region3: #{tpu_custom_call.1} parent=1 // loop_header
      %s16 = sphi 0, %s20
      %p17 = scmp.ge.s32.totalorder %s16, 4
      %s23 = sphi 0, %s42
      %s24 = sphi 0, %s38
      %s25 = sphi 0, %s34
      %s26 = sphi 0, %s23
      %s27 = sphi 0, %s24
      %s28 = sphi 0, %s25
      %s29 = sphi 0, %s26
      %s30 = sphi 0, %s27
      %s31 = sphi 0, %s28
      %s45 = sphi 0, %s47
      %s48 = sphi 0, %s45
      %s49 = sphi 0, %s48
      %s65 = sphi 0, %s49
      %s75 = sphi 0, %s77
      %s78 = sphi 0, %s75
      %s79 = sphi 0, %s78
      %s95 = sphi 0, %s79
      %s105 = sphi 0, %s107
      %s108 = sphi 0, %s105
      %s109 = sphi 0, %s108
      %s125 = sphi 0, %s109
      %s135 = sphi 0, %s137
      %s138 = sphi 0, %s135
      %s139 = sphi 0, %s138
      %s155 = sphi 0, %s139
    $region4: #{tpu_custom_call.1} parent=1 // loop_header_branch
      %19 = sbr.rel (%p17) target = $region8
    $region5: #{tpu_custom_call.1} parent=1 // loop_body
      %s21 = ssub.s32 %s16, 1
      %s22 = ssub.s32 %s16, 2
      %s32 = sadd.s32 1, %s25
      %p33 = scmp.ge.s32.totalorder %s32, 1
      %s34 = scalar_select %p33, 0, %s32
      %s35 = sadd.s32 1, %s24
      %s36 = scalar_select %p33, %s35, %s24
      %p37 = scmp.ge.s32.totalorder %s36, 2
      %s38 = scalar_select %p37, 0, %s36
      %s39 = sadd.s32 1, %s23
      %s40 = scalar_select %p37, %s39, %s23
      %p41 = scmp.ge.s32.totalorder %s40, 1
      %s42 = scalar_select %p41, 0, %s40
      %s43 = ssub.s32 %s23, %s42
      %p44 = scmp.eq.s32.totalorder %s43, 0
      %s46 = sadd.s32 %s45, 1
      %s47 = scalar_select %p44, %s45, %s46
      %p50 = pneg %p44
      %p51 = scmp.eq.s32.totalorder %s16, 1
      %p52 = por %p50, %p51
      %p53 = scmp.ne.s32.totalorder %s45, %s48
      %p54 = scmp.eq.s32.totalorder %s16, 0
      %p55 = por %p53, %p54
      %p56 = scmp.ne.s32.totalorder %s45, %s48
      %p57 = scmp.eq.s32.totalorder %s21, 1
      %p58 = por %p56, %p57
      %p59 = scmp.ne.s32.totalorder %s48, %s49
      %p60 = scmp.eq.s32.totalorder %s21, 0
      %p61 = por %p59, %p60
      %p62 = scmp.ne.s32.totalorder %s48, %s49
      %p63 = scmp.eq.s32.totalorder %s22, 1
      %p64 = por %p62, %p63
      %p66 = scmp.ne.s32.totalorder %s49, %s65
      %p67 = scmp.eq.s32.totalorder %s22, 0
      %p68 = por %p66, %p67
      %s69 = ssub.s32 1, %s24
      %s70 = smul.u32 %s25, %s69
      %s71 = ssub.s32 1, %s38
      %s72 = smul.u32 %s34, %s71
      %s73 = ssub.s32 %s70, %s72
      %p74 = scmp.eq.s32.totalorder %s73, 0
      %s76 = sadd.s32 %s75, 1
      %s77 = scalar_select %p74, %s75, %s76
      %p80 = pneg %p74
      %p81 = scmp.eq.s32.totalorder %s16, 1
      %p82 = por %p80, %p81
      %p83 = scmp.ne.s32.totalorder %s75, %s78
      %p84 = scmp.eq.s32.totalorder %s16, 0
      %p85 = por %p83, %p84
      %p86 = scmp.ne.s32.totalorder %s75, %s78
      %p87 = scmp.eq.s32.totalorder %s21, 1
      %p88 = por %p86, %p87
      %p89 = scmp.ne.s32.totalorder %s78, %s79
      %p90 = scmp.eq.s32.totalorder %s21, 0
      %p91 = por %p89, %p90
      %p92 = scmp.ne.s32.totalorder %s78, %s79
      %p93 = scmp.eq.s32.totalorder %s22, 1
      %p94 = por %p92, %p93
      %p96 = scmp.ne.s32.totalorder %s79, %s95
      %p97 = scmp.eq.s32.totalorder %s22, 0
      %p98 = por %p96, %p97
      %s99 = ssub.s32 1, %s24
      %s100 = smul.u32 %s25, %s99
      %s101 = ssub.s32 1, %s38
      %s102 = smul.u32 %s34, %s101
      %s103 = ssub.s32 %s100, %s102
      %p104 = scmp.eq.s32.totalorder %s103, 0
      %s106 = sadd.s32 %s105, 1
      %s107 = scalar_select %p104, %s105, %s106
      %p110 = pneg %p104
      %p111 = scmp.eq.s32.totalorder %s16, 1
      %p112 = por %p110, %p111
      %p113 = scmp.ne.s32.totalorder %s105, %s108
      %p114 = scmp.eq.s32.totalorder %s16, 0
      %p115 = por %p113, %p114
      %p116 = scmp.ne.s32.totalorder %s105, %s108
      %p117 = scmp.eq.s32.totalorder %s21, 1
      %p118 = por %p116, %p117
      %p119 = scmp.ne.s32.totalorder %s108, %s109
      %p120 = scmp.eq.s32.totalorder %s21, 0
      %p121 = por %p119, %p120
      %p122 = scmp.ne.s32.totalorder %s108, %s109
      %p123 = scmp.eq.s32.totalorder %s22, 1
      %p124 = por %p122, %p123
      %p126 = scmp.ne.s32.totalorder %s109, %s125
      %p127 = scmp.eq.s32.totalorder %s22, 0
      %p128 = por %p126, %p127
      %s129 = smul.u32 %s25, %s24
      %s130 = smul.u32 %s34, %s38
      %s131 = ssub.s32 %s23, %s42
      %s132 = ssub.s32 %s129, %s130
      %s133 = sor.u32 %s131, %s132
      %p134 = scmp.eq.s32.totalorder %s133, 0
      %s136 = sadd.s32 %s135, 1
      %s137 = scalar_select %p134, %s135, %s136
      %p140 = pneg %p134
      %p141 = scmp.eq.s32.totalorder %s16, 1
      %p142 = por %p140, %p141
      %p143 = scmp.ne.s32.totalorder %s135, %s138
      %p144 = scmp.eq.s32.totalorder %s16, 0
      %p145 = por %p143, %p144
      %p146 = scmp.ne.s32.totalorder %s135, %s138
      %p147 = scmp.eq.s32.totalorder %s21, 1
      %p148 = por %p146, %p147
      %p149 = scmp.ne.s32.totalorder %s138, %s139
      %p150 = scmp.eq.s32.totalorder %s21, 0
      %p151 = por %p149, %p150
      %p152 = scmp.ne.s32.totalorder %s138, %s139
      %p153 = scmp.eq.s32.totalorder %s22, 1
      %p154 = por %p152, %p153
      %p156 = scmp.ne.s32.totalorder %s139, %s155
      %p157 = scmp.eq.s32.totalorder %s22, 0
      %p158 = por %p156, %p157
      %p159 = scmp.le.s32.totalorder 1, %s16
      %p160 = scmp.lt.s32.totalorder %s16, 3
      %p161 = pnand %p159, %p160
      %p162 = pneg %p161
      // Predicated region
      $region9: #{tpu_custom_call.1} parent=5 // pred_check
        _
      $region10: #{tpu_custom_call.1} parent=5 // pred_check_branch
        %164 = sbr.rel (%p161) target = $region12
      $region11: #{tpu_custom_call.1} parent=5 // pred_region
        %s165 = ssub.s32 %s16, 1
        // Predicated region
        $region13: #{tpu_custom_call.1} parent=11 // pred_check
          %p166 = pneg %p61
        $region14: #{tpu_custom_call.1} parent=11 // pred_check_branch
          %168 = sbr.rel (%p166) target = $region16
        $region15: #{tpu_custom_call.1} parent=11 // pred_region
          %s169 = smul.u32 2, %s26
          %s171 = ssub.s32 128, 128
          %172 = vsyncadd [#allocation6], %s171
          %s173 = smul.addr %s169, 64
          %s174 = scalar_lea.hbm %s0, %s173
          %s175 = sshll.u32 [#allocation5], 4
          %s176 = int_to_ptr.vmem [resolvable:$true] %s175
          %181 = dma.hbm_to_vmem [thread:$0]  %s174, 128, %s176, [#allocation6], 64, 64, 4
        $region16: #{tpu_custom_call.1} parent=11 // pred_fallthru
          _
      $region12: #{tpu_custom_call.1} parent=5 // pred_fallthru
        _
      %p182 = scmp.lt.s32.totalorder %s16, 2
      // Predicated region
      $region17: #{tpu_custom_call.1} parent=5 // pred_check
        %p183 = pneg %p182
      $region18: #{tpu_custom_call.1} parent=5 // pred_check_branch
        %185 = sbr.rel (%p183) target = $region20
      $region19: #{tpu_custom_call.1} parent=5 // pred_region
        // Predicated region
        $region21: #{tpu_custom_call.1} parent=19 // pred_check
          %p186 = pneg %p85
        $region22: #{tpu_custom_call.1} parent=19 // pred_check_branch
          %188 = sbr.rel (%p186) target = $region24
        $region23: #{tpu_custom_call.1} parent=19 // pred_region
          %s189 = sand.u32 %s75, 1
          %s190 = scalar_lea.sflag [#allocation9], %s189
          %s191 = sand.u32 %s75, 1
          %s192 = smul.addr %s191, 16
          %s193 = scalar_lea.vmem [#allocation8], %s192
          %s194 = ssub.s32 1, %s24
          %s195 = smul.u32 %s25, %s194
          %s197 = ssub.s32 256, 256
          %198 = vsyncadd %s190, %s197
          %s199 = smul.addr %s195, 64
          %s200 = scalar_lea.hbm %s1, %s199
          %s201 = sshll.u32 %s193, 4
          %s202 = int_to_ptr.vmem [resolvable:$true] %s201
          %207 = dma.hbm_to_vmem [thread:$0]  %s200, 256, %s202, %s190, 64, 64, 4
        $region24: #{tpu_custom_call.1} parent=19 // pred_fallthru
          _
        // Predicated region
        $region25: #{tpu_custom_call.1} parent=19 // pred_check
          %p208 = pneg %p115
        $region26: #{tpu_custom_call.1} parent=19 // pred_check_branch
          %210 = sbr.rel (%p208) target = $region28
        $region27: #{tpu_custom_call.1} parent=19 // pred_region
          %s211 = ssub.s32 1, %s24
          %s212 = smul.u32 %s25, %s211
          %p213 = scmp.lt.s32.totalorder %s212, 0
          %s214 = scalar_select %p213, %s212, 0
          %s215 = scalar_lea.vmem %s2, %s214
          %s216 = ssub.s32 1, %s24
          %s217 = smul.u32 %s25, %s216
        $region28: #{tpu_custom_call.1} parent=19 // pred_fallthru
          _
      $region20: #{tpu_custom_call.1} parent=5 // pred_fallthru
        _
      %p218 = scmp.le.s32.totalorder 1, %s16
      %p219 = scmp.lt.s32.totalorder %s16, 3
      %p220 = pnand %p218, %p219
      %p221 = pneg %p220
      // Predicated region
      $region29: #{tpu_custom_call.1} parent=5 // pred_check
        _
      $region30: #{tpu_custom_call.1} parent=5 // pred_check_branch
        %223 = sbr.rel (%p220) target = $region32
      $region31: #{tpu_custom_call.1} parent=5 // pred_region
        %s224 = ssub.s32 %s16, 1
        // Predicated region
        $region33: #{tpu_custom_call.1} parent=31 // pred_check
          %p225 = pneg %p61
        $region34: #{tpu_custom_call.1} parent=31 // pred_check_branch
          %227 = sbr.rel (%p225) target = $region36
        $region35: #{tpu_custom_call.1} parent=31 // pred_region
          %228 = dma.done [#allocation6], 128
        $region36: #{tpu_custom_call.1} parent=31 // pred_fallthru
          _
        %s229 = sand.u32 %s78, 1
        %s230 = scalar_lea.sflag [#allocation9], %s229
        %s231 = sand.u32 %s78, 1
        %s232 = smul.addr %s231, 16
        %s233 = scalar_lea.vmem [#allocation8], %s232
        // Predicated region
        $region37: #{tpu_custom_call.1} parent=31 // pred_check
          %p234 = pneg %p91
        $region38: #{tpu_custom_call.1} parent=31 // pred_check_branch
          %236 = sbr.rel (%p234) target = $region40
        $region39: #{tpu_custom_call.1} parent=31 // pred_region
          %237 = dma.done %s230, 256
        $region40: #{tpu_custom_call.1} parent=31 // pred_fallthru
          _
        %p238 = pneg %p61
        %p239 = pneg %p58
        %s240 = sand.u32 %s78, 1
        %s241 = scalar_lea.sflag [#allocation9], %s240
        %s242 = sand.u32 %s78, 1
        %s243 = smul.addr %s242, 16
        %s244 = scalar_lea.vmem [#allocation8], %s243
        %p245 = pneg %p91
        %p246 = pneg %p88
        %s247 = ssub.s32 1, %s27
        %s248 = smul.u32 %s28, %s247
        %p249 = scmp.lt.s32.totalorder %s248, 0
        %s250 = scalar_select %p249, %s248, 0
        %s251 = scalar_lea.vmem %s2, %s250
        %p252 = pneg %p121
        %p253 = pneg %p118
        %p254 = pneg %p151
        %p255 = pneg %p148
        %s256 = sand.u32 %s138, 1
        %s257 = scalar_lea.sflag [#allocation7], %s256
        %s258 = sand.u32 %s138, 1
        %s259 = smul.addr %s258, 16
        %s260 = scalar_lea.vmem [#allocation10], %s259
        %s261 = smul.u32 2, %s26
        %s262 = ssub.s32 1, %s27
        %s263 = smul.u32 %s28, %s262
        %s264 = ssub.s32 1, %s27
        %s265 = smul.u32 %s28, %s264
        %p266 = scmp.lt.s32.totalorder %s265, 0
        %s267 = scalar_select %p266, %s265, 0
        %s268 = scalar_lea.vmem %s2, %s267
        %s269 = ssub.s32 1, %s27
        %s270 = smul.u32 %s28, %s269
        %s271 = smul.u32 %s28, %s27
        %s272 = smul.u32 2, %s26
        %p274 = scmp.eq.s32.totalorder %s27, 0
        %p275 = scmp.eq.s32.totalorder %s28, 0
        %p276 = pnand %p274, %p275
        %p277 = pneg %p276
        // Predicated region
        $region41: #{tpu_custom_call.1} parent=31 // pred_check
          _
        $region42: #{tpu_custom_call.1} parent=31 // pred_check_branch
          %279 = sbr.rel (%p276) target = $region44
        $region43: #{tpu_custom_call.1} parent=31 // pred_region
          %vm280 = vcmask 7168
          %281 = vst.msk [vmem:[#allocation2] sm:$0xff] %vm280, -inf
          %282 = vst.msk [vmem:[#allocation2 + $0x8] sm:$0xff] %vm280, -inf
          %283 = vst.msk [vmem:[#allocation3] sm:$0xff] %vm280, 0.0
          %284 = vst.msk [vmem:[#allocation3 + $0x8] sm:$0xff] %vm280, 0.0
        $region44: #{tpu_custom_call.1} parent=31 // pred_fallthru
          _
        // Predicated region
        $region45: #{tpu_custom_call.1} parent=31 // pred_check
          %p285 = pneg %p274
        $region46: #{tpu_custom_call.1} parent=31 // pred_check_branch
          %287 = sbr.rel (%p285) target = $region48
        $region47: #{tpu_custom_call.1} parent=31 // pred_region
          %v288 = vld [vmem:[#allocation5] sm:$0xf]
          %v289 = vld [vmem:[#allocation5 + $0x4] sm:$0xf]
          %v290 = vld [vmem:[%s233] sm:$0xf]
          %v291 = vld [vmem:[%s233 + $0x4] sm:$0xf]
          %v292 = vld [vmem:[%s233 + $0x8] sm:$0xf]
          %v293 = vld [vmem:[%s233 + $0xc] sm:$0xf]
          %v294 = vld [vmem:[%s268] sm:$0x1]
          %v296 = vlaneseq
          %v297 = vshrl.u32 %v296, 7
          %v298 = vsub.s32 0, %v297
          %v299 = vrot.slane %v294, %v298
          %v303 = vunpack.c.l.b16 %v288
          %v304 = vunpack.c.l.b16 %v289
          %v305 = vpack.c.b16 %v304, %v303
          %v310 = vunpack.c.l.b16 %v290
          %v311 = vunpack.c.l.b16 %v291
          %v312 = vunpack.c.l.b16 %v292
          %v313 = vunpack.c.l.b16 %v293
          %v314 = vpack.c.b16 %v311, %v310
          %v315 = vpack.c.b16 %v313, %v312
          %vm318 = vcmask 261120
          %v320 = vsel %vm318, %v305, 0
          %322 = vmatprep.subr.bf16.mxu0 0
          %323 = vmatpush1.bf16.msra.mxu0 %v314
          %324 = vmatprep.subr.bf16.mxu0 0
          %325 = vmatpush1.bf16.msra.mxu0 %v315
          %326 = vmatprep.subr.bf16.mxu0 0
          %327 = vmatpush1.bf16.msra.mxu0 0
          %328 = vmatprep.subr.bf16.mxu0 0
          %329 = vmatpush1.bf16.msra.mxu0 0
          %330 = vmatprep.subr.bf16.mxu0 0
          %331 = vmatpush1.bf16.msra.mxu0 0
          %332 = vmatprep.subr.bf16.mxu0 0
          %333 = vmatpush1.bf16.msra.mxu0 0
          %334 = vmatprep.subr.bf16.mxu0 0
          %335 = vmatpush1.bf16.msra.mxu0 0
          %336 = vmatprep.subr.bf16.mxu0 0
          %337 = vmatpush1.bf16.msra.mxu0 0
          %338 = vmatprep.subr.bf16.mxu0 0
          %339 = vmatpush1.bf16.msra.mxu0 0
          %340 = vmatprep.subr.bf16.mxu0 0
          %341 = vmatpush1.bf16.msra.mxu0 0
          %342 = vmatprep.subr.bf16.mxu0 0
          %343 = vmatpush1.bf16.msra.mxu0 0
          %344 = vmatprep.subr.bf16.mxu0 0
          %345 = vmatpush1.bf16.msra.mxu0 0
          %346 = vmatprep.subr.bf16.mxu0 0
          %347 = vmatpush1.bf16.msra.mxu0 0
          %348 = vmatprep.subr.bf16.mxu0 0
          %349 = vmatpush1.bf16.msra.mxu0 0
          %350 = vmatprep.subr.bf16.mxu0 0
          %351 = vmatpush1.bf16.msra.mxu0 0
          %352 = vmatprep.subr.bf16.mxu0 0
          %353 = vmatpush1.bf16.msra.mxu0 0
          %354 = vmatprep.mubr.bf16.mxu0 0
          %355 = vmatmul.mubr.bf16.gmra.mrb[0].mxu0 %v320
          %v356 = vpop.f32.mrb[0].mxu0
          %v357 = vadd.f32 %v299, %v356
          %v358 = vpop.f32.mrb[0].mxu0
          %v359 = vpop.f32.mrb[0].mxu0
          %v360 = vadd.f32 %v299, %v359
          %v361 = vpop.f32.mrb[0].mxu0
          %362 = vdwg.mxu0
          %s363 = smul.u32 %s28, 16
          %s364 = scalar_lea.vmem [#allocation4], %s363
          %365 = vst [vmem:[%s364] sm:$0xff] %v357
          %366 = vst [vmem:[%s364 + $0x8] sm:$0xff] %v360
          %v367 = vld [vmem:[#allocation2] sm:$0xff]
          %v368 = vld [vmem:[#allocation2 + $0x8] sm:$0xff]
          %369 = vmax.xlane.f32.xlu0 %v357
          %v370 = vpop.xlane.xlu0 %369
          %371 = vmax.xlane.f32.xlu0 %v360
          %v372 = vpop.xlane.xlu0 %371
          %v373 = vmax.f32 %v367, %v370
          %v374 = vmax.f32 %v368, %v372
          %v375 = vld [vmem:[#allocation3] sm:$0xff]
          %v376 = vld [vmem:[#allocation3 + $0x8] sm:$0xff]
          %v377 = vsub.f32 %v367, %v373
          %v378 = vsub.f32 %v368, %v374
          %v379 = vmul.f32 %v377, 1.442695
          %v380 = vpow.pop %v379
          %v381 = vmul.f32 %v378, 1.442695
          %v382 = vpow.pop %v381
          %v383 = vmul.f32 %v375, %v380
          %v384 = vmul.f32 %v376, %v382
          %386 = vset.pattern.permute.xlu0 0
          %387 = vperm.xlu0 %386, %v373
          %v388 = vpop.permute.xlu0 %387
          %391 = vset.pattern.permute.xlu0 0
          %392 = vperm.xlu0 %391, %v374
          %v393 = vpop.permute.xlu0 %392
          %v395 = vsub.f32 %v357, %v388
          %v396 = vsub.f32 %v360, %v393
          %v397 = vmul.f32 %v395, 1.442695
          %v398 = vpow.pop %v397
          %v399 = vmul.f32 %v396, 1.442695
          %v400 = vpow.pop %v399
          %401 = vadd.xlane.f32.xlu0 %v398
          %v402 = vpop.xlane.xlu0 %401
          %403 = vadd.xlane.f32.xlu0 %v400
          %v404 = vpop.xlane.xlu0 %403
          %v405 = vadd.f32 %v383, %v402
          %v406 = vadd.f32 %v384, %v404
          %vm407 = vcmask 7168
          %408 = vst.msk [vmem:[#allocation3] sm:$0xff] %vm407, %v405
          %409 = vst.msk [vmem:[#allocation3 + $0x8] sm:$0xff] %vm407, %v406
          %410 = vst.msk [vmem:[#allocation2] sm:$0xff] %vm407, %v373
          %411 = vst.msk [vmem:[#allocation2 + $0x8] sm:$0xff] %vm407, %v374
        $region48: #{tpu_custom_call.1} parent=31 // pred_fallthru
          _
        %p412 = scmp.eq.s32.totalorder %s27, 1
        %p413 = pnand %p412, %p275
        %p414 = pneg %p413
        // Predicated region
        $region49: #{tpu_custom_call.1} parent=31 // pred_check
          _
        $region50: #{tpu_custom_call.1} parent=31 // pred_check_branch
          %416 = sbr.rel (%p413) target = $region52
        $region51: #{tpu_custom_call.1} parent=31 // pred_region
          %v417 = vld [vmem:[#allocation2] sm:$0xff]
          %v418 = vld [vmem:[#allocation2 + $0x8] sm:$0xff]
          %v419 = vld [vmem:[#allocation3] sm:$0xff]
          %v420 = vld [vmem:[#allocation3 + $0x8] sm:$0xff]
          %v421 = vlog2.pop %v419
          %v422 = vmul.f32 %v421, 0.6931472
          %v423 = vlog2.pop %v420
          %v424 = vmul.f32 %v423, 0.6931472
          %v425 = vadd.f32 %v417, %v422
          %v426 = vadd.f32 %v418, %v424
          %vm427 = vcmask 7168
          %428 = vst.msk [vmem:[#allocation2] sm:$0xff] %vm427, %v425
          %429 = vst.msk [vmem:[#allocation2 + $0x8] sm:$0xff] %vm427, %v426
        $region52: #{tpu_custom_call.1} parent=31 // pred_fallthru
          _
        // Predicated region
        $region53: #{tpu_custom_call.1} parent=31 // pred_check
          %p430 = pneg %p412
        $region54: #{tpu_custom_call.1} parent=31 // pred_check_branch
          %432 = sbr.rel (%p430) target = $region56
        $region55: #{tpu_custom_call.1} parent=31 // pred_region
          %s433 = smul.u32 %s28, 16
          %s434 = scalar_lea.vmem [#allocation4], %s433
          %v435 = vld [vmem:[%s434] sm:$0xff]
          %v436 = vld [vmem:[%s434 + $0x8] sm:$0xff]
          %v437 = vld [vmem:[#allocation2] sm:$0xff]
          %v438 = vld [vmem:[#allocation2 + $0x8] sm:$0xff]
          %440 = vset.pattern.permute.xlu0 0
          %441 = vperm.xlu0 %440, %v437
          %v442 = vpop.permute.xlu0 %441
          %445 = vset.pattern.permute.xlu0 0
          %446 = vperm.xlu0 %445, %v438
          %v447 = vpop.permute.xlu0 %446
          %v449 = vsub.f32 %v435, %v442
          %v450 = vsub.f32 %v436, %v447
          %451 = vst [vmem:[%s260] sm:$0xff] %v449
          %452 = vst [vmem:[%s260 + $0x8] sm:$0xff] %v450
        $region56: #{tpu_custom_call.1} parent=31 // pred_fallthru
          _
        %s453 = sand.u32 %s138, 1
        %s454 = scalar_lea.sflag [#allocation7], %s453
        %s455 = sand.u32 %s138, 1
        %s456 = smul.addr %s455, 16
        %s457 = scalar_lea.vmem [#allocation10], %s456
        // Predicated region
        $region57: #{tpu_custom_call.1} parent=31 // pred_check
          %p458 = pneg %p148
        $region58: #{tpu_custom_call.1} parent=31 // pred_check_branch
          %460 = sbr.rel (%p458) target = $region60
        $region59: #{tpu_custom_call.1} parent=31 // pred_region
          %s461 = smul.u32 %s28, %s27
          %s462 = smul.u32 2, %s26
          %s464 = ssub.s32 256, 256
          %465 = vsyncadd %s454, %s464
          %s466 = sadd.s32 %s461, %s462
          %s467 = smul.addr %s466, 128
          %s468 = scalar_lea.hbm %s3, %s467
          %s469 = sshll.u32 %s457, 4
          %s470 = int_to_ptr.vmem [resolvable:$true] %s469
          %475 = dma.vmem_to_hbm [thread:$0]  %s470, 256, %s468, %s454, 128, 128, 8
        $region60: #{tpu_custom_call.1} parent=31 // pred_fallthru
          _
      $region32: #{tpu_custom_call.1} parent=5 // pred_fallthru
        _
      %p476 = scmp.le.s32.totalorder 2, %s16
      // Predicated region
      $region61: #{tpu_custom_call.1} parent=5 // pred_check
        %p477 = pneg %p476
      $region62: #{tpu_custom_call.1} parent=5 // pred_check_branch
        %479 = sbr.rel (%p477) target = $region64
      $region63: #{tpu_custom_call.1} parent=5 // pred_region
        %s480 = ssub.s32 %s16, 2
        // Predicated region
        $region65: #{tpu_custom_call.1} parent=63 // pred_check
          %p481 = pneg %p154
        $region66: #{tpu_custom_call.1} parent=63 // pred_check_branch
          %483 = sbr.rel (%p481) target = $region68
        $region67: #{tpu_custom_call.1} parent=63 // pred_region
          %s484 = sand.u32 %s139, 1
          %s485 = scalar_lea.sflag [#allocation7], %s484
          %s486 = sand.u32 %s139, 1
          %s487 = smul.addr %s486, 16
          %s488 = scalar_lea.vmem [#allocation10], %s487
          %489 = dma.done %s485, 256
        $region68: #{tpu_custom_call.1} parent=63 // pred_fallthru
          _
      $region64: #{tpu_custom_call.1} parent=5 // pred_fallthru
        _
    $region6: #{tpu_custom_call.1} parent=1 // loop_footer
      %s20 = sadd.s32 1, %s16
    $region7: #{tpu_custom_call.1} parent=1 // loop_footer_branch
      %15 = sbr.rel target = $region3
    $region8: #{tpu_custom_call.1} parent=1 // loop_exit
      _
    %490 = vsyncpa [#allocation6], 1
    %s491 = scalar_lea.sflag [#allocation6], 1
    %492 = vsyncpa %s491, 1
    %493 = vsyncpa [#allocation9], 1
    %s494 = scalar_lea.sflag [#allocation9], 1
    %495 = vsyncpa %s494, 1
    %496 = vsyncpa [#allocation7], 1
    %s497 = scalar_lea.sflag [#allocation7], 1
    %498 = vsyncpa %s497, 1

</llo_original>
